<compile_context>
chip_gen: v7x
topology: tpu7x:2x2x1
jax: 0.10.0
libtpu: 0.0.40
codegen_flags: <defaults>
</compile_context>

<pallas_src>
import functools

import jax
import jax.numpy as jnp
from jax.experimental import pallas as pl
from jax.experimental.pallas import tpu as pltpu


def _variation_loss_kernel(x_ref, mask_ref, partial_ref, *, H, W):
    """One grid step: TB flattened image slices -> one partial sum tile."""
    HW = H * W
    x = x_ref[...].astype(jnp.float32)              # (TB, H*W), lane-dense
    # Neighbour below (h+1, w) and to the right (h, w+1) in flattened lanes:
    # pltpu.roll == jnp.roll semantics, so roll(x, HW - k)[p] = x[(p + k) % HW].
    x_down = pltpu.roll(x, HW - W, axis=1)
    x_right = pltpu.roll(x, HW - 1, axis=1)
    dv = x - x_down
    dh = x - x_right
    # mask is 1.0 where (h < H-1) & (w < W-1); zeroes boundary/wrapped terms.
    sq = (dv * dv + dh * dh) * mask_ref[...]        # (1, HW) broadcasts over TB
    block_sum = jnp.sum(sq)
    partial_ref[...] = jnp.broadcast_to(block_sum, partial_ref.shape)


def _pick_block_rows(nc, hw, itemsize, target_bytes=2 << 20):
    """Rows (image slices) per block.

    Whole array if it already fits the target; otherwise the largest
    multiple-of-8 divisor of `nc` whose block stays under `target_bytes`.
    """
    if nc * hw * itemsize <= target_bytes:
        return nc
    max_rows = max(1, target_bytes // (hw * itemsize))
    best = 0
    t = 8
    while t <= max_rows:
        if nc % t == 0:
            best = t
        t += 8
    # TODO(synk): for very large single images (H*W*itemsize > target) tile H
    # with a 1-row halo instead of loading a whole slice per block.
    return best if best else nc


def variation_loss(x, block_rows=None):
    """x: (N, C, H, W).  Returns (x, loss) where loss is a scalar f32."""
    N, C, H, W = x.shape
    if H < 2 or W < 2:
        raise ValueError("VariationLoss requires H >= 2 and W >= 2")

    NC = N * C
    HW = H * W
    xf = x.reshape(NC, HW)                          # lane-dense, free reshape

    if block_rows is None:
        block_rows = _pick_block_rows(NC, HW, x.dtype.itemsize)
    if NC % block_rows != 0:
        raise ValueError(f"block_rows={block_rows} must divide N*C={NC}")
    TB = block_rows
    G = NC // TB

    # 0/1 validity mask over flattened (h, w): keep h < H-1 and w < W-1.
    hh = (jnp.arange(H) < (H - 1)).astype(jnp.float32)
    ww = (jnp.arange(W) < (W - 1)).astype(jnp.float32)
    mask = (hh[:, None] * ww[None, :]).reshape(1, HW)

    kernel = functools.partial(_variation_loss_kernel, H=H, W=W)

    partials = pl.pallas_call(
        kernel,
        out_shape=jax.ShapeDtypeStruct((G, 8, 128), jnp.float32),
        grid_spec=pltpu.PrefetchScalarGridSpec(
            num_scalar_prefetch=0,
            grid=(G,),
            in_specs=[
                pl.BlockSpec((TB, HW), lambda i: (i, 0)),
                pl.BlockSpec((1, HW), lambda i: (0, 0)),
            ],
            out_specs=pl.BlockSpec((1, 8, 128), lambda i: (i, 0, 0)),
        ),
        compiler_params=pltpu.CompilerParams(
            dimension_semantics=("parallel",),
            vmem_limit_bytes=32 * 1024 * 1024,
        ),
    )(xf, mask)

    denom = jnp.float32(NC * (H - 1) * (W - 1))     # mse divides by full count
    loss = jnp.sum(partials[:, 0, 0]) / denom
    return x, loss


def _reference_loss(x):
    xf = x.astype(jnp.float32)
    a = jnp.mean((xf[:, :, :-1, :-1] - xf[:, :, 1:, :-1]) ** 2)
    b = jnp.mean((xf[:, :, :-1, :-1] - xf[:, :, :-1, 1:]) ** 2)
    return a + b


if __name__ == "__main__":
    key = jax.random.PRNGKey(0)

    # Case 1: module test shape, f32, single block.
    x = jax.random.normal(key, (2, 4, 16, 16), dtype=jnp.float32)
    out, loss = variation_loss(x)
    out = jax.block_until_ready(out)
    loss = jax.block_until_ready(loss)
    assert out.shape == x.shape and out.dtype == x.dtype
    assert bool(jnp.all(out == x))
    ref = jax.block_until_ready(_reference_loss(x))
    assert jnp.allclose(loss, ref, rtol=1e-5, atol=1e-6), (loss, ref)

    # Case 2: multiple grid blocks (parallel partial sums), f32.
    x2 = jax.random.normal(jax.random.PRNGKey(1), (4, 4, 16, 16), jnp.float32)
    _, loss2 = variation_loss(x2, block_rows=8)
    loss2 = jax.block_until_ready(loss2)
    ref2 = jax.block_until_ready(_reference_loss(x2))
    assert jnp.allclose(loss2, ref2, rtol=1e-5, atol=1e-6), (loss2, ref2)

    # Case 3: bf16 input stays bf16 in HBM, upcast in-kernel.
    x3 = x.astype(jnp.bfloat16)
    out3, loss3 = variation_loss(x3)
    loss3 = jax.block_until_ready(loss3)
    assert out3.dtype == jnp.bfloat16
    ref3 = jax.block_until_ready(_reference_loss(x3))
    assert jnp.allclose(loss3, ref3, rtol=1e-4, atol=1e-5), (loss3, ref3)

    print("KERNEL_OK")
</pallas_src>

<mosaic_0001>
module attributes {stable_mosaic.version = 11 : i64} {
  func.func @_variation_loss_kernel(%arg0: i32, %arg1: memref<8x256xf32, #tpu.memory_space<vmem>>, %arg2: memref<1x256xf32, #tpu.memory_space<vmem>>, %arg3: memref<1x8x128xf32, #tpu.memory_space<vmem>>) attributes {dimension_semantics = [#tpu.dimension_semantics<parallel>], iteration_bounds = array<i64: 1>, scalar_prefetch = 0 : i64, scratch_operands = 0 : i64, tpu.core_type = #tpu.core_type<tc>, window_params = [{transform_indices = @transform_0, window_bounds = array<i64: 8, 256>}, {pipeline_mode = #tpu.pipeline_mode<synchronous>, transform_indices = @transform_1, window_bounds = array<i64: 1, 256>}, {transform_indices = @transform_2, window_bounds = array<i64: 1, 8, 128>}]} {
    %c0 = arith.constant 0 : index
    %c0_0 = arith.constant 0 : index
    %0 = vector.load %arg1[%c0, %c0_0] : memref<8x256xf32, #tpu.memory_space<vmem>>, vector<8x256xf32>
    %c240_i32 = arith.constant 240 : i32
    %1 = tpu.dynamic_rotate %0 by %c240_i32 dim 1 : vector<8x256xf32>, i32 -> vector<8x256xf32>
    %c255_i32 = arith.constant 255 : i32
    %2 = tpu.dynamic_rotate %0 by %c255_i32 dim 1 : vector<8x256xf32>, i32 -> vector<8x256xf32>
    %3 = arith.subf %0, %1 : vector<8x256xf32>
    %4 = arith.subf %0, %2 : vector<8x256xf32>
    %5 = arith.mulf %3, %3 : vector<8x256xf32>
    %6 = arith.mulf %4, %4 : vector<8x256xf32>
    %7 = arith.addf %5, %6 : vector<8x256xf32>
    %c0_1 = arith.constant 0 : index
    %c0_2 = arith.constant 0 : index
    %8 = vector.load %arg2[%c0_1, %c0_2] : memref<1x256xf32, #tpu.memory_space<vmem>>, vector<1x256xf32>
    %9 = vector.broadcast %8 : vector<1x256xf32> to vector<8x256xf32>
    %10 = arith.mulf %7, %9 : vector<8x256xf32>
    %11 = vector.shape_cast %10 : vector<8x256xf32> to vector<1x8x256xf32>
    %cst = arith.constant dense<0.000000e+00> : vector<1xf32>
    %12 = vector.multi_reduction <add>, %11, %cst [1, 2] : vector<1x8x256xf32> to vector<1xf32>
    %13 = vector.shape_cast %12 : vector<1xf32> to vector<1x1x1xf32>
    %14 = vector.extract %13[0, 0, 0] : f32 from vector<1x1x1xf32>
    %15 = vector.broadcast %14 : f32 to vector<1x8x128xf32>
    %c0_3 = arith.constant 0 : index
    %c0_4 = arith.constant 0 : index
    %c0_5 = arith.constant 0 : index
    %16 = vector.load %arg3[%c0_3, %c0_4, %c0_5] : memref<1x8x128xf32, #tpu.memory_space<vmem>>, vector<1x8x128xf32>
    tpu.vector_store %arg3[%c0_3, %c0_4, %c0_5], %15 {strides = array<i32>} : memref<1x8x128xf32, #tpu.memory_space<vmem>>, vector<1x8x128xf32>,
    return
  }
  func.func @transform_0(%arg0: i32) -> (i32, i32) {
    %c0_i32 = arith.constant 0 : i32
    %c0_i32_0 = arith.constant 0 : i32
    return %arg0, %c0_i32 : i32, i32
  }
  func.func @transform_1(%arg0: i32) -> (i32, i32) {
    %c0_i32 = arith.constant 0 : i32
    %c0_i32_0 = arith.constant 0 : i32
    %c0_i32_1 = arith.constant 0 : i32
    return %c0_i32, %c0_i32_0 : i32, i32
  }
  func.func @transform_2(%arg0: i32) -> (i32, i32, i32) {
    %c0_i32 = arith.constant 0 : i32
    %c0_i32_0 = arith.constant 0 : i32
    %c0_i32_1 = arith.constant 0 : i32
    return %arg0, %c0_i32, %c0_i32_0 : i32, i32, i32
  }
}

</mosaic_0001>

<llo_original>
// kernel: tpu_custom_call.1
$region0: #{tpu_custom_call.1}
  #allocation0 [shape = 'u32[]', space=smem, size = 0x4, offset = 0x4, fixed_abs, tag = 'smem constant byte address 0x4 - core index']
  #allocation1 [shape = 'u32[144,128]{1,0:T(1,128)}', space=vmem, size = 0x12000, scoped, tag = 'internal scratch']
  %s0 = inlined_call_operand.hbm [shape: f32[8,256], index: 0, kind: input, shape index: {}]
  %s1 = inlined_call_operand.vmem [shape: f32[1,256], index: 1, kind: input, shape index: {}]
  %s2 = inlined_call_operand.hbm [shape: f32[1,8,128], index: 2, kind: output, shape index: {}]
  %s3 = sld [smem:[#allocation0]]
  $region22: #{tpu_custom_call.1} parent=0
    _
  %s5 = ssub.s32 1, %s3
  %s6 = scalar_select 0, %s5, %s3
  $region1: #{tpu_custom_call.1} parent=0
    #allocation2 [shape = 'u8[8192]{0}', space=vmem, size = 0x2000, scoped, tag = 'input window, operand 0, single buffered']
    #allocation3 [shape = 's32[1]{0}', space=sflag, size = 0x4, scoped, tag = 'scoped memory for tpu_custom_call.1']
    #allocation4 [shape = 's32[1]{0}', space=sflag, size = 0x4, scoped, tag = 'scoped memory for tpu_custom_call.1']
    #allocation5 [shape = 'u8[4096]{0}', space=vmem, size = 0x1000, scoped, tag = 'output window, operand 0, single buffered']
    %7 = vsyncpa [#allocation3], 0
    %8 = vsyncpa [#allocation4], 0
    // Predicated region
    $region2: #{tpu_custom_call.1} parent=1 // pred_check
      _
    $region3: #{tpu_custom_call.1} parent=1 // pred_check_branch
      %10 = sbr.rel (0) target = $region5
    $region4: #{tpu_custom_call.1} parent=1 // pred_region
      %s12 = ssub.s32 256, 256
      %13 = vsyncadd [#allocation3], %s12
      %s15 = sshll.u32 [#allocation2], 4
      %s16 = int_to_ptr.vmem [resolvable:$true] %s15
      %18 = dma.hbm_to_vmem [thread:$0]  %s0, 256, %s16, [#allocation3]
    $region5: #{tpu_custom_call.1} parent=1 // pred_fallthru
      _
    // Predicated region
    $region6: #{tpu_custom_call.1} parent=1 // pred_check
      _
    $region7: #{tpu_custom_call.1} parent=1 // pred_check_branch
      %20 = sbr.rel (0) target = $region9
    $region8: #{tpu_custom_call.1} parent=1 // pred_region
      _
    $region9: #{tpu_custom_call.1} parent=1 // pred_fallthru
      _
    // Predicated region
    $region10: #{tpu_custom_call.1} parent=1 // pred_check
      _
    $region11: #{tpu_custom_call.1} parent=1 // pred_check_branch
      %22 = sbr.rel (0) target = $region13
    $region12: #{tpu_custom_call.1} parent=1 // pred_region
      %23 = dma.done [#allocation3], 256
    $region13: #{tpu_custom_call.1} parent=1 // pred_fallthru
      _
    %v24 = vld [vmem:[#allocation2] sm:$0xff]
    %v25 = vld [vmem:[#allocation2 + $0x8] sm:$0xff]
    %26 = vrot.lane.b32.xlu0 %v24, 112
    %v27 = vpop.permute.xlu0 %26
    %28 = vrot.lane.b32.xlu0 %v25, 112
    %v29 = vpop.permute.xlu0 %28
    %v30 = vlaneseq
    %v31 = vand.u32 %v30, 127
    %vm32 = vcmp.lt.s32.totalorder %v31, 112
    %v33 = vsel %vm32, %v27, %v29
    %v34 = vsel %vm32, %v29, %v27
    %35 = vrot.lane.b32.xlu0 %v24, 127
    %v36 = vpop.permute.xlu0 %35
    %37 = vrot.lane.b32.xlu0 %v25, 127
    %v38 = vpop.permute.xlu0 %37
    %vm39 = vcmp.lt.s32.totalorder %v31, 127
    %v40 = vsel %vm39, %v36, %v38
    %v41 = vsel %vm39, %v38, %v36
    %v42 = vsub.f32 %v24, %v33
    %v43 = vsub.f32 %v25, %v34
    %v44 = vsub.f32 %v24, %v40
    %v45 = vsub.f32 %v25, %v41
    %v46 = vmul.f32 %v42, %v42
    %v47 = vmul.f32 %v43, %v43
    %v48 = vmul.f32 %v44, %v44
    %v49 = vmul.f32 %v45, %v45
    %v50 = vadd.f32 %v46, %v48
    %v51 = vadd.f32 %v47, %v49
    %v52 = vld [vmem:[%s1] sm:$0x3]
    %v54 = vlaneseq
    %v55 = vshrl.u32 %v54, 7
    %v56 = vsub.s32 0, %v55
    %v57 = vrot.slane %v52, %v56
    %v58 = vlaneseq
    %v59 = vshrl.u32 %v58, 7
    %v60 = vsub.s32 1, %v59
    %v61 = vrot.slane %v52, %v60
    %v64 = vmul.f32 %v50, %v57
    %v65 = vmul.f32 %v51, %v61
    %v66 = vadd.f32 %v64, %v65
    %67 = vadd.xlane.f32.xlu0 %v66
    %v68 = vpop.xlane.xlu0 %67
    %v69 = vrot.slane %v68, 4
    %v70 = vadd.f32 %v68, %v69
    %v71 = vrot.slane %v70, 2
    %v72 = vadd.f32 %v70, %v71
    %v73 = vrot.slane %v72, 1
    %v74 = vadd.f32 %v72, %v73
    %s75 = vtos %v74
    %v76 = vstv %s75
    %77 = vst [vmem:[#allocation5] sm:$0xff] %v76
    // Predicated region
    $region14: #{tpu_custom_call.1} parent=1 // pred_check
      _
    $region15: #{tpu_custom_call.1} parent=1 // pred_check_branch
      %79 = sbr.rel (0) target = $region17
    $region16: #{tpu_custom_call.1} parent=1 // pred_region
      %s81 = ssub.s32 128, 128
      %82 = vsyncadd [#allocation4], %s81
      %s84 = sshll.u32 [#allocation5], 4
      %s85 = int_to_ptr.vmem [resolvable:$true] %s84
      %87 = dma.vmem_to_hbm [thread:$0]  %s85, 128, %s2, [#allocation4]
    $region17: #{tpu_custom_call.1} parent=1 // pred_fallthru
      _
    // Predicated region
    $region18: #{tpu_custom_call.1} parent=1 // pred_check
      _
    $region19: #{tpu_custom_call.1} parent=1 // pred_check_branch
      %89 = sbr.rel (0) target = $region21
    $region20: #{tpu_custom_call.1} parent=1 // pred_region
      %90 = dma.done [#allocation4], 128
    $region21: #{tpu_custom_call.1} parent=1 // pred_fallthru
      _
    %91 = vsyncpa [#allocation3], 1
    %92 = vsyncpa [#allocation4], 1

</llo_original>
